<compile_context>
chip_gen: v6e
topology: v6e:2x2x1
jax: 0.10.0
libtpu: 0.0.40
codegen_flags: <defaults>
</compile_context>

<pallas_src>
import functools

import jax
import jax.numpy as jnp
from jax.experimental import pallas as pl
from jax.experimental.pallas import tpu as pltpu


def _cdiv(a, b):
    return -(-a // b)


def _round_up(v, m):
    return _cdiv(v, m) * m


def _tpu_config():
    """(vmem_capacity_bytes, num_tensorcores) for the current chip, safe fallback."""
    vmem_cap = 64 * 1024 * 1024
    num_cores = None
    try:
        info = pltpu.get_tpu_info()
        vmem_cap = int(getattr(info, "vmem_capacity_bytes", vmem_cap))
        for name in ("num_tensorcores", "tensorcore_count", "num_cores"):
            v = getattr(info, name, None)
            if isinstance(v, int) and v > 0:
                num_cores = v
                break
    except Exception:
        pass
    if num_cores is None:
        # Heuristic: v7x exposes 64 MiB VMEM per TensorCore and has 2 TCs/chip;
        # v5e/v6e expose 128 MiB on a single TC.
        num_cores = 2 if vmem_cap <= 64 * 1024 * 1024 else 1
    return vmem_cap, num_cores


def _rmse_log_partial_kernel(x_ref, t_ref, m_ref, ssq_ref, smk_ref, *, clamp_val):
    """Accumulate per-row / per-lane partial sums of ((log x - log t) * m)^2 and m."""
    k = pl.program_id(2)

    @pl.when(k == 0)
    def _init():
        ssq_ref[...] = jnp.zeros_like(ssq_ref)
        smk_ref[...] = jnp.zeros_like(smk_ref)

    x = jnp.maximum(x_ref[...].astype(jnp.float32), clamp_val)
    t = jnp.maximum(t_ref[...].astype(jnp.float32), clamp_val)
    m = m_ref[...].astype(jnp.float32)

    # (|log x - log t| * m)^2 -> abs dropped (squared anyway). Two separate logs
    # (not log(x/t)): matches the torch reference numerics and avoids x/t
    # under/overflow; the extra transcendental is free under the HBM roofline.
    d = (jnp.log(x) - jnp.log(t)) * m

    # Per-lane accumulation only (sublane reduce over this tile's column axis);
    # the cross-lane / cross-split / cross-row-tile reduce happens once in the
    # wrapper.
    ssq_ref[...] += jnp.sum(d * d, axis=1)[None]
    smk_ref[...] += jnp.sum(m, axis=1)[None]


def rmse_log_loss(inp, target, valid_mask, *, clamp_val=1e-9, reduction="mean"):
    """Pallas implementation of RMSElogLoss.forward.

    inp, target, valid_mask: (N, C, H, W) arrays (NCHW); mask may be bool/int/float.
    """
    N, C, H, W = inp.shape
    D = C * H * W

    x = inp.reshape(N, D)
    t = target.reshape(N, D)
    m = valid_mask.reshape(N, D)

    # --- dtype normalization: this kernel is HBM-BW bound, so ship the
    # narrowest streams that preserve semantics. x/t keep bf16 if the caller
    # provides it, else f32. A boolean / integer 0/1 mask ships as int8;
    # floating masks keep their dtype (fractional masks allowed).
    if x.dtype not in (jnp.float32, jnp.bfloat16):
        x = x.astype(jnp.float32)
    if t.dtype not in (jnp.float32, jnp.bfloat16):
        t = t.astype(jnp.float32)
    if m.dtype == jnp.bool_ or jnp.issubdtype(m.dtype, jnp.integer):
        m = m.astype(jnp.int8)
    elif m.dtype not in (jnp.float32, jnp.bfloat16):
        m = m.astype(jnp.float32)

    # --- sublane folding for small N: view (N, D) as (N*fold, D/fold) row-major
    # so row blocks fill vreg sublanes; regrouped in the finalize.
    fold = 1
    if N < 8:
        for f in (8, 4, 2):
            if D % f == 0:
                fold = f
                break
    rows = N * fold
    Dw = D // fold
    x = x.reshape(rows, Dw)
    t = t.reshape(rows, Dw)
    m = m.reshape(rows, Dw)

    # --- generation-aware tile / grid selection --------------------------------
    vmem_cap, num_cores = _tpu_config()
    # Budget for the per-step working set: double-buffered input blocks plus
    # ~2 block-sized f32 temporaries (upcasts / intermediates).
    work_budget = min(int(vmem_cap * 0.6), 48 * 1024 * 1024)

    elem_bytes = x.dtype.itemsize + t.dtype.itemsize + m.dtype.itemsize
    per_elem_vmem = 2 * elem_bytes + 8  # 2x double-buffer + 2x f32 temporaries

    n128 = _cdiv(Dw, 128)            # column extent in 128-lane units
    rows8 = _round_up(rows, 8)
    rows_block = min(rows8, 256)     # row tiling: no large-batch VMEM cliff

    if n128 < 64:
        # Tiny column extent: one full-width column block (full-dim block, so
        # no 32-col tiling constraint). Any parallelism / pipelining comes from
        # the row axis; at this size the column pipeline is irrelevant.
        num_splits, k_tiles, tile_cols = 1, 1, n128
    else:
        # Split the column axis across TensorCores (2 on v7x, 1 on v5e/v6e) and
        # keep >=4 pipeline steps per split so DMA overlaps the log/EUP compute.
        num_splits = num_cores if n128 >= 64 * num_cores else 1
        cols_per_split = _cdiv(n128, num_splits)
        bytes_per_col = rows_block * 128 * per_elem_vmem
        tile_cols_cap = max(32, (work_budget // bytes_per_col) // 32 * 32)
        tile_cols = min(tile_cols_cap, _round_up(_cdiv(cols_per_split, 4), 32))
        k_tiles = _cdiv(cols_per_split, tile_cols)

    # Shrink the row block if the chosen column tile would overflow the budget.
    while rows_block > 8 and rows_block * tile_cols * 128 * per_elem_vmem > work_budget:
        rows_block = max(8, _round_up(rows_block // 2, 8))

    r_tiles = _cdiv(rows8, rows_block)
    rows_p = r_tiles * rows_block
    tot_cols = num_splits * k_tiles * tile_cols
    Dp = tot_cols * 128

    # --- padding: padded rows/cols contribute nothing (mask=0, log(1)-log(1)=0).
    pad_r = rows_p - rows
    pad_c = Dp - Dw
    if pad_r or pad_c:
        x = jnp.pad(x, ((0, pad_r), (0, pad_c)), constant_values=1.0)
        t = jnp.pad(t, ((0, pad_r), (0, pad_c)), constant_values=1.0)
        m = jnp.pad(m, ((0, pad_r), (0, pad_c)), constant_values=0)

    x3 = x.reshape(rows_p, tot_cols, 128)
    t3 = t.reshape(rows_p, tot_cols, 128)
    m3 = m.reshape(rows_p, tot_cols, 128)

    # VMEM limit: double-buffered inputs + f32 temporaries + (resident) outputs.
    in_block_bytes = rows_block * tile_cols * 128 * elem_bytes
    temp_bytes = 2 * rows_block * tile_cols * 128 * 4
    out_block_bytes = 2 * 2 * rows_block * 128 * 4
    vmem_limit = int((2 * in_block_bytes + temp_bytes + out_block_bytes) * 1.25)
    vmem_limit = max(16 * 1024 * 1024, min(vmem_limit, int(vmem_cap * 0.9)))

    kernel = functools.partial(_rmse_log_partial_kernel, clamp_val=clamp_val)

    in_map = lambda s, r, k: (r, s * k_tiles + k, 0)
    out_map = lambda s, r, k: (s, r, 0)

    cost = pl.CostEstimate(
        flops=6 * rows_p * Dp,
        transcendentals=2 * rows_p * Dp,
        bytes_accessed=int(x3.size * x3.dtype.itemsize
                           + t3.size * t3.dtype.itemsize
                           + m3.size * m3.dtype.itemsize
                           + 2 * num_splits * rows_p * 128 * 4),
    )

    ssq, smk = pl.pallas_call(
        kernel,
        out_shape=(
            jax.ShapeDtypeStruct((num_splits, rows_p, 128), jnp.float32),
            jax.ShapeDtypeStruct((num_splits, rows_p, 128), jnp.float32),
        ),
        grid_spec=pltpu.PrefetchScalarGridSpec(
            num_scalar_prefetch=0,
            grid=(num_splits, r_tiles, k_tiles),
            in_specs=[
                pl.BlockSpec((rows_block, tile_cols, 128), in_map),
                pl.BlockSpec((rows_block, tile_cols, 128), in_map),
                pl.BlockSpec((rows_block, tile_cols, 128), in_map),
            ],
            out_specs=[
                pl.BlockSpec((1, rows_block, 128), out_map),
                pl.BlockSpec((1, rows_block, 128), out_map),
            ],
        ),
        compiler_params=pltpu.CompilerParams(
            # split & row axes are independent (shardable across TensorCores on
            # v7x); the column-reduction axis is last and "arbitrary".
            dimension_semantics=("parallel", "parallel", "arbitrary"),
            vmem_limit_bytes=vmem_limit,
        ),
        cost_estimate=cost,
    )(x3, t3, m3)

    # --- finalize (tiny, plain JAX): combine splits + lanes, drop padded rows,
    # regroup fold groups, divide, sqrt.
    per_row_ssq = ssq.sum(axis=(0, 2))[:rows]
    per_row_m = smk.sum(axis=(0, 2))[:rows]
    sumsq = per_row_ssq.reshape(N, fold).sum(axis=1)
    summask = per_row_m.reshape(N, fold).sum(axis=1)
    batched_loss = jnp.sqrt(sumsq / summask)  # all-zero mask row -> NaN, same as torch

    if reduction == "mean":
        return jnp.mean(batched_loss)
    if reduction == "sum":
        return jnp.sum(batched_loss)
    # TODO(synk): reduction='none' is an UnboundLocalError in the PyTorch
    # reference; return per-batch losses instead for usability.
    return batched_loss


def _ref_rmse_log_loss(inp, target, valid_mask, clamp_val=1e-9, reduction="mean"):
    N = inp.shape[0]
    x = jnp.log(jnp.maximum(inp.reshape(N, -1).astype(jnp.float32), clamp_val))
    t = jnp.log(jnp.maximum(target.reshape(N, -1).astype(jnp.float32), clamp_val))
    m = valid_mask.reshape(N, -1).astype(jnp.float32)
    l1 = jnp.abs(x - t) * m
    bm = jnp.sum(l1 ** 2, axis=1) / jnp.sum(m, axis=1)
    bl = jnp.sqrt(bm)
    if reduction == "mean":
        return jnp.mean(bl)
    if reduction == "sum":
        return jnp.sum(bl)
    return bl


if __name__ == "__main__":
    key = jax.random.PRNGKey(0)
    k1, k2, k3 = jax.random.split(key, 3)

    N, C, H, W = 2, 4, 16, 16
    # positive-ish inputs (depths), as the loss expects
    inp = jax.random.uniform(k1, (N, C, H, W), jnp.float32, 0.1, 10.0)
    target = jax.random.uniform(k2, (N, C, H, W), jnp.float32, 0.1, 10.0)
    # 0/1 validity mask; the wrapper ships boolean masks as int8 (narrow stream)
    valid_mask = jax.random.uniform(k3, (N, C, H, W)) > 0.3

    out = rmse_log_loss(inp, target, valid_mask, reduction="mean")
    out = jax.block_until_ready(out)

    ref = _ref_rmse_log_loss(inp, target, valid_mask, reduction="mean")
    assert jnp.allclose(out, ref, rtol=1e-5, atol=1e-6), (out, ref)

    print("KERNEL_OK")
</pallas_src>

<mosaic_0001>
module attributes {stable_mosaic.version = 11 : i64} {
  func.func @_rmse_log_partial_kernel(%arg0: i32, %arg1: i32, %arg2: i32, %arg3: memref<16x1x128xf32, #tpu.memory_space<vmem>>, %arg4: memref<16x1x128xf32, #tpu.memory_space<vmem>>, %arg5: memref<16x1x128xi8, #tpu.memory_space<vmem>>, %arg6: memref<1x16x128xf32, #tpu.memory_space<vmem>>, %arg7: memref<1x16x128xf32, #tpu.memory_space<vmem>>) attributes {dimension_semantics = [#tpu.dimension_semantics<parallel>, #tpu.dimension_semantics<parallel>, #tpu.dimension_semantics<arbitrary>], iteration_bounds = array<i64: 1, 1, 1>, scalar_prefetch = 0 : i64, scratch_operands = 0 : i64, tpu.core_type = #tpu.core_type<tc>, window_params = [{transform_indices = @transform_0, window_bounds = array<i64: 16, 1, 128>}, {transform_indices = @transform_1, window_bounds = array<i64: 16, 1, 128>}, {transform_indices = @transform_2, window_bounds = array<i64: 16, 1, 128>}, {transform_indices = @transform_3, window_bounds = array<i64: 1, 16, 128>}, {transform_indices = @transform_4, window_bounds = array<i64: 1, 16, 128>}]} {
    %c0_i32 = arith.constant 0 : i32
    %0 = arith.cmpi eq, %arg2, %c0_i32 : i32
    %1 = arith.extui %0 : i1 to i32
    %c0_i32_0 = arith.constant 0 : i32
    %2 = arith.cmpi ne, %1, %c0_i32_0 : i32
    scf.if %2 {
      %cst_24 = arith.constant 0.000000e+00 : f32
      %26 = vector.broadcast %cst_24 : f32 to vector<1x16x128xf32>
      %c0_25 = arith.constant 0 : index
      %c0_26 = arith.constant 0 : index
      %c0_27 = arith.constant 0 : index
      %27 = vector.load %arg6[%c0_25, %c0_26, %c0_27] : memref<1x16x128xf32, #tpu.memory_space<vmem>>, vector<1x16x128xf32>
      tpu.vector_store %arg6[%c0_25, %c0_26, %c0_27], %26 {strides = array<i32>} : memref<1x16x128xf32, #tpu.memory_space<vmem>>, vector<1x16x128xf32>,
      %cst_28 = arith.constant 0.000000e+00 : f32
      %28 = vector.broadcast %cst_28 : f32 to vector<1x16x128xf32>
      %c0_29 = arith.constant 0 : index
      %c0_30 = arith.constant 0 : index
      %c0_31 = arith.constant 0 : index
      %29 = vector.load %arg7[%c0_29, %c0_30, %c0_31] : memref<1x16x128xf32, #tpu.memory_space<vmem>>, vector<1x16x128xf32>
      tpu.vector_store %arg7[%c0_29, %c0_30, %c0_31], %28 {strides = array<i32>} : memref<1x16x128xf32, #tpu.memory_space<vmem>>, vector<1x16x128xf32>,
    } else {
    }
    %c0 = arith.constant 0 : index
    %c0_1 = arith.constant 0 : index
    %c0_2 = arith.constant 0 : index
    %3 = vector.load %arg3[%c0, %c0_1, %c0_2] : memref<16x1x128xf32, #tpu.memory_space<vmem>>, vector<16x1x128xf32>
    %cst = arith.constant 9.99999971E-10 : f32
    %4 = vector.broadcast %cst : f32 to vector<16x1x128xf32>
    %5 = arith.maximumf %3, %4 : vector<16x1x128xf32>
    %c0_3 = arith.constant 0 : index
    %c0_4 = arith.constant 0 : index
    %c0_5 = arith.constant 0 : index
    %6 = vector.load %arg4[%c0_3, %c0_4, %c0_5] : memref<16x1x128xf32, #tpu.memory_space<vmem>>, vector<16x1x128xf32>
    %cst_6 = arith.constant 9.99999971E-10 : f32
    %7 = vector.broadcast %cst_6 : f32 to vector<16x1x128xf32>
    %8 = arith.maximumf %6, %7 : vector<16x1x128xf32>
    %c0_7 = arith.constant 0 : index
    %c0_8 = arith.constant 0 : index
    %c0_9 = arith.constant 0 : index
    %9 = vector.load %arg5[%c0_7, %c0_8, %c0_9] : memref<16x1x128xi8, #tpu.memory_space<vmem>>, vector<16x1x128xi8>
    %10 = arith.sitofp %9 : vector<16x1x128xi8> to vector<16x1x128xf32>
    %11 = math.log %5 : vector<16x1x128xf32>
    %12 = math.log %8 : vector<16x1x128xf32>
    %13 = arith.subf %11, %12 : vector<16x1x128xf32>
    %14 = arith.mulf %13, %10 : vector<16x1x128xf32>
    %c0_10 = arith.constant 0 : index
    %c0_11 = arith.constant 0 : index
    %c0_12 = arith.constant 0 : index
    %15 = vector.load %arg6[%c0_10, %c0_11, %c0_12] : memref<1x16x128xf32, #tpu.memory_space<vmem>>, vector<1x16x128xf32>
    %16 = arith.mulf %14, %14 : vector<16x1x128xf32>
    %cst_13 = arith.constant dense<0.000000e+00> : vector<16x128xf32>
    %17 = vector.multi_reduction <add>, %16, %cst_13 [1] : vector<16x1x128xf32> to vector<16x128xf32>
    %18 = vector.shape_cast %17 : vector<16x128xf32> to vector<1x16x128xf32>
    %19 = arith.addf %15, %18 : vector<1x16x128xf32>
    %c0_14 = arith.constant 0 : index
    %c0_15 = arith.constant 0 : index
    %c0_16 = arith.constant 0 : index
    %20 = vector.load %arg6[%c0_14, %c0_15, %c0_16] : memref<1x16x128xf32, #tpu.memory_space<vmem>>, vector<1x16x128xf32>
    tpu.vector_store %arg6[%c0_14, %c0_15, %c0_16], %19 {strides = array<i32>} : memref<1x16x128xf32, #tpu.memory_space<vmem>>, vector<1x16x128xf32>,
    %c0_17 = arith.constant 0 : index
    %c0_18 = arith.constant 0 : index
    %c0_19 = arith.constant 0 : index
    %21 = vector.load %arg7[%c0_17, %c0_18, %c0_19] : memref<1x16x128xf32, #tpu.memory_space<vmem>>, vector<1x16x128xf32>
    %cst_20 = arith.constant dense<0.000000e+00> : vector<16x128xf32>
    %22 = vector.multi_reduction <add>, %10, %cst_20 [1] : vector<16x1x128xf32> to vector<16x128xf32>
    %23 = vector.shape_cast %22 : vector<16x128xf32> to vector<1x16x128xf32>
    %24 = arith.addf %21, %23 : vector<1x16x128xf32>
    %c0_21 = arith.constant 0 : index
    %c0_22 = arith.constant 0 : index
    %c0_23 = arith.constant 0 : index
    %25 = vector.load %arg7[%c0_21, %c0_22, %c0_23] : memref<1x16x128xf32, #tpu.memory_space<vmem>>, vector<1x16x128xf32>
    tpu.vector_store %arg7[%c0_21, %c0_22, %c0_23], %24 {strides = array<i32>} : memref<1x16x128xf32, #tpu.memory_space<vmem>>, vector<1x16x128xf32>,
    return
  }
  func.func @transform_0(%arg0: i32, %arg1: i32, %arg2: i32) -> (i32, i32, i32) {
    %c1_i32 = arith.constant 1 : i32
    %0 = arith.muli %arg0, %c1_i32 : i32
    %1 = arith.addi %0, %arg2 : i32
    %c0_i32 = arith.constant 0 : i32
    %c0_i32_0 = arith.constant 0 : i32
    return %arg1, %1, %c0_i32 : i32, i32, i32
  }
  func.func @transform_1(%arg0: i32, %arg1: i32, %arg2: i32) -> (i32, i32, i32) {
    %c1_i32 = arith.constant 1 : i32
    %0 = arith.muli %arg0, %c1_i32 : i32
    %1 = arith.addi %0, %arg2 : i32
    %c0_i32 = arith.constant 0 : i32
    %c0_i32_0 = arith.constant 0 : i32
    return %arg1, %1, %c0_i32 : i32, i32, i32
  }
  func.func @transform_2(%arg0: i32, %arg1: i32, %arg2: i32) -> (i32, i32, i32) {
    %c1_i32 = arith.constant 1 : i32
    %0 = arith.muli %arg0, %c1_i32 : i32
    %1 = arith.addi %0, %arg2 : i32
    %c0_i32 = arith.constant 0 : i32
    %c0_i32_0 = arith.constant 0 : i32
    return %arg1, %1, %c0_i32 : i32, i32, i32
  }
  func.func @transform_3(%arg0: i32, %arg1: i32, %arg2: i32) -> (i32, i32, i32) {
    %c0_i32 = arith.constant 0 : i32
    %c0_i32_0 = arith.constant 0 : i32
    return %arg0, %arg1, %c0_i32 : i32, i32, i32
  }
  func.func @transform_4(%arg0: i32, %arg1: i32, %arg2: i32) -> (i32, i32, i32) {
    %c0_i32 = arith.constant 0 : i32
    %c0_i32_0 = arith.constant 0 : i32
    return %arg0, %arg1, %c0_i32 : i32, i32, i32
  }
}

</mosaic_0001>

<llo_original>
// kernel: tpu_custom_call.1
$region0: #{tpu_custom_call.1}
  #allocation0 [shape = 'u32[]', space=smem, size = 0x4, offset = 0x4, fixed_abs, tag = 'smem constant byte address 0x4 - core index']
  #allocation1 [shape = 'u32[144,128]{1,0:T(1,128)}', space=vmem, size = 0x12000, scoped, tag = 'internal scratch']
  %s0 = inlined_call_operand.vmem [shape: f32[16,1,128], index: 0, kind: input, shape index: {}]
  %s1 = inlined_call_operand.hbm [shape: f32[16,1,128], index: 1, kind: input, shape index: {}]
  %s2 = inlined_call_operand.vmem [shape: s8[16,1,128], index: 2, kind: input, shape index: {}]
  %s3 = inlined_call_operand.hbm [shape: f32[1,16,128], index: 3, kind: output, shape index: {0}]
  %s4 = inlined_call_operand.hbm [shape: f32[1,16,128], index: 4, kind: output, shape index: {1}]
  %5 = xla_tuple %s3, %s4
  %s6 = sld [smem:[#allocation0]]
  $region38: #{tpu_custom_call.1} parent=0
    _
  %s8 = ssub.s32 1, %s6
  %s9 = scalar_select 0, %s8, %s6
  $region1: #{tpu_custom_call.1} parent=0
    #allocation2 [shape = 'u8[8192]{0}', space=vmem, size = 0x2000, scoped, tag = 'input window, operand 1, single buffered']
    #allocation3 [shape = 's32[1]{0}', space=sflag, size = 0x4, scoped, tag = 'scoped memory for tpu_custom_call.1']
    #allocation4 [shape = 's32[1]{0}', space=sflag, size = 0x4, scoped, tag = 'scoped memory for tpu_custom_call.1']
    #allocation5 [shape = 'u8[8192]{0}', space=vmem, size = 0x2000, scoped, tag = 'output window, operand 0, single buffered']
    #allocation6 [shape = 'u8[8192]{0}', space=vmem, size = 0x2000, scoped, tag = 'output window, operand 1, single buffered']
    #allocation7 [shape = 's32[1]{0}', space=sflag, size = 0x4, scoped, tag = 'scoped memory for tpu_custom_call.1']
    %10 = vsyncpa [#allocation3], 0
    %11 = vsyncpa [#allocation4], 0
    %12 = vsyncpa [#allocation7], 0
    // Predicated region
    $region2: #{tpu_custom_call.1} parent=1 // pred_check
      _
    $region3: #{tpu_custom_call.1} parent=1 // pred_check_branch
      %14 = sbr.rel (0) target = $region5
    $region4: #{tpu_custom_call.1} parent=1 // pred_region
      %s15 = sadd.s32 0, 0
      %p16 = scmp.lt.s32.totalorder %s15, 0
      %s17 = scalar_select %p16, %s15, 0
      %s18 = scalar_lea.vmem %s0, %s17
      %s19 = sadd.s32 0, 0
    $region5: #{tpu_custom_call.1} parent=1 // pred_fallthru
      _
    // Predicated region
    $region6: #{tpu_custom_call.1} parent=1 // pred_check
      _
    $region7: #{tpu_custom_call.1} parent=1 // pred_check_branch
      %21 = sbr.rel (0) target = $region9
    $region8: #{tpu_custom_call.1} parent=1 // pred_region
      %s22 = sadd.s32 0, 0
      %s24 = ssub.s32 256, 256
      %25 = vsyncadd [#allocation3], %s24
      %s26 = smul.addr %s22, 16
      %s27 = scalar_lea.hbm %s1, %s26
      %s28 = sshll.u32 [#allocation2], 4
      %s29 = int_to_ptr.vmem [resolvable:$true] %s28
      %34 = dma.hbm_to_vmem [thread:$0]  %s27, 256, %s29, [#allocation3], 16, 16, 1
    $region9: #{tpu_custom_call.1} parent=1 // pred_fallthru
      _
    // Predicated region
    $region10: #{tpu_custom_call.1} parent=1 // pred_check
      _
    $region11: #{tpu_custom_call.1} parent=1 // pred_check_branch
      %36 = sbr.rel (0) target = $region13
    $region12: #{tpu_custom_call.1} parent=1 // pred_region
      %s37 = sadd.s32 0, 0
      %p38 = scmp.lt.s32.totalorder %s37, 0
      %s39 = scalar_select %p38, %s37, 0
      %s40 = scalar_lea.vmem %s2, %s39
      %s41 = sadd.s32 0, 0
    $region13: #{tpu_custom_call.1} parent=1 // pred_fallthru
      _
    // Predicated region
    $region14: #{tpu_custom_call.1} parent=1 // pred_check
      _
    $region15: #{tpu_custom_call.1} parent=1 // pred_check_branch
      %43 = sbr.rel (0) target = $region17
    $region16: #{tpu_custom_call.1} parent=1 // pred_region
      %44 = dma.done [#allocation3], 256
    $region17: #{tpu_custom_call.1} parent=1 // pred_fallthru
      _
    %s45 = sadd.s32 0, 0
    %p46 = scmp.lt.s32.totalorder %s45, 0
    %s47 = scalar_select %p46, %s45, 0
    %s48 = scalar_lea.vmem %s0, %s47
    %s49 = sadd.s32 0, 0
    %p50 = scmp.lt.s32.totalorder %s49, 0
    %s51 = scalar_select %p50, %s49, 0
    %s52 = scalar_lea.vmem %s2, %s51
    %s53 = sadd.s32 0, 0
    %p54 = scmp.lt.s32.totalorder %s53, 0
    %s55 = scalar_select %p54, %s53, 0
    %s56 = scalar_lea.vmem %s0, %s55
    %s57 = sadd.s32 0, 0
    %s58 = sadd.s32 0, 0
    %s59 = sadd.s32 0, 0
    %p60 = scmp.lt.s32.totalorder %s59, 0
    %s61 = scalar_select %p60, %s59, 0
    %s62 = scalar_lea.vmem %s2, %s61
    %s63 = sadd.s32 0, 0
    %p64 = scmp.eq.s32.totalorder 0, 0
    // Predicated region
    $region18: #{tpu_custom_call.1} parent=1 // pred_check
      %p65 = pneg %p64
    $region19: #{tpu_custom_call.1} parent=1 // pred_check_branch
      %67 = sbr.rel (%p65) target = $region21
    $region20: #{tpu_custom_call.1} parent=1 // pred_region
      %68 = vst [vmem:[#allocation5] sm:$0xff] 0.0
      %69 = vst [vmem:[#allocation5 + $0x8] sm:$0xff] 0.0
      %70 = vst [vmem:[#allocation6] sm:$0xff] 0.0
      %71 = vst [vmem:[#allocation6 + $0x8] sm:$0xff] 0.0
    $region21: #{tpu_custom_call.1} parent=1 // pred_fallthru
      _
    %v72 = vld [vmem:[%s56] sm:$0x1]
    %v73 = vld [vmem:[%s56 + $0x1] sm:$0x1]
    %v74 = vld [vmem:[%s56 + $0x2] sm:$0x1]
    %v75 = vld [vmem:[%s56 + $0x3] sm:$0x1]
    %v76 = vld [vmem:[%s56 + $0x4] sm:$0x1]
    %v77 = vld [vmem:[%s56 + $0x5] sm:$0x1]
    %v78 = vld [vmem:[%s56 + $0x6] sm:$0x1]
    %v79 = vld [vmem:[%s56 + $0x7] sm:$0x1]
    %v80 = vld [vmem:[%s56 + $0x8] sm:$0x1]
    %v81 = vld [vmem:[%s56 + $0x9] sm:$0x1]
    %v82 = vld [vmem:[%s56 + $0xa] sm:$0x1]
    %v83 = vld [vmem:[%s56 + $0xb] sm:$0x1]
    %v84 = vld [vmem:[%s56 + $0xc] sm:$0x1]
    %v85 = vld [vmem:[%s56 + $0xd] sm:$0x1]
    %v86 = vld [vmem:[%s56 + $0xe] sm:$0x1]
    %v87 = vld [vmem:[%s56 + $0xf] sm:$0x1]
    %v88 = vmax.f32 %v72, 1e-09
    %v89 = vmax.f32 %v73, 1e-09
    %v90 = vmax.f32 %v74, 1e-09
    %v91 = vmax.f32 %v75, 1e-09
    %v92 = vmax.f32 %v76, 1e-09
    %v93 = vmax.f32 %v77, 1e-09
    %v94 = vmax.f32 %v78, 1e-09
    %v95 = vmax.f32 %v79, 1e-09
    %v96 = vmax.f32 %v80, 1e-09
    %v97 = vmax.f32 %v81, 1e-09
    %v98 = vmax.f32 %v82, 1e-09
    %v99 = vmax.f32 %v83, 1e-09
    %v100 = vmax.f32 %v84, 1e-09
    %v101 = vmax.f32 %v85, 1e-09
    %v102 = vmax.f32 %v86, 1e-09
    %v103 = vmax.f32 %v87, 1e-09
    %v104 = vld [vmem:[#allocation2] sm:$0x1]
    %v105 = vld [vmem:[#allocation2 + $0x1] sm:$0x1]
    %v106 = vld [vmem:[#allocation2 + $0x2] sm:$0x1]
    %v107 = vld [vmem:[#allocation2 + $0x3] sm:$0x1]
    %v108 = vld [vmem:[#allocation2 + $0x4] sm:$0x1]
    %v109 = vld [vmem:[#allocation2 + $0x5] sm:$0x1]
    %v110 = vld [vmem:[#allocation2 + $0x6] sm:$0x1]
    %v111 = vld [vmem:[#allocation2 + $0x7] sm:$0x1]
    %v112 = vld [vmem:[#allocation2 + $0x8] sm:$0x1]
    %v113 = vld [vmem:[#allocation2 + $0x9] sm:$0x1]
    %v114 = vld [vmem:[#allocation2 + $0xa] sm:$0x1]
    %v115 = vld [vmem:[#allocation2 + $0xb] sm:$0x1]
    %v116 = vld [vmem:[#allocation2 + $0xc] sm:$0x1]
    %v117 = vld [vmem:[#allocation2 + $0xd] sm:$0x1]
    %v118 = vld [vmem:[#allocation2 + $0xe] sm:$0x1]
    %v119 = vld [vmem:[#allocation2 + $0xf] sm:$0x1]
    %v120 = vmax.f32 %v104, 1e-09
    %v121 = vmax.f32 %v105, 1e-09
    %v122 = vmax.f32 %v106, 1e-09
    %v123 = vmax.f32 %v107, 1e-09
    %v124 = vmax.f32 %v108, 1e-09
    %v125 = vmax.f32 %v109, 1e-09
    %v126 = vmax.f32 %v110, 1e-09
    %v127 = vmax.f32 %v111, 1e-09
    %v128 = vmax.f32 %v112, 1e-09
    %v129 = vmax.f32 %v113, 1e-09
    %v130 = vmax.f32 %v114, 1e-09
    %v131 = vmax.f32 %v115, 1e-09
    %v132 = vmax.f32 %v116, 1e-09
    %v133 = vmax.f32 %v117, 1e-09
    %v134 = vmax.f32 %v118, 1e-09
    %v135 = vmax.f32 %v119, 1e-09
    %v136 = vld [vmem:[%s62] sm:$0x1]
    %v137 = vld [vmem:[%s62 + $0x1] sm:$0x1]
    %v138 = vld [vmem:[%s62 + $0x2] sm:$0x1]
    %v139 = vld [vmem:[%s62 + $0x3] sm:$0x1]
    %v140 = vld [vmem:[%s62 + $0x4] sm:$0x1]
    %v141 = vld [vmem:[%s62 + $0x5] sm:$0x1]
    %v142 = vld [vmem:[%s62 + $0x6] sm:$0x1]
    %v143 = vld [vmem:[%s62 + $0x7] sm:$0x1]
    %v144 = vld [vmem:[%s62 + $0x8] sm:$0x1]
    %v145 = vld [vmem:[%s62 + $0x9] sm:$0x1]
    %v146 = vld [vmem:[%s62 + $0xa] sm:$0x1]
    %v147 = vld [vmem:[%s62 + $0xb] sm:$0x1]
    %v148 = vld [vmem:[%s62 + $0xc] sm:$0x1]
    %v149 = vld [vmem:[%s62 + $0xd] sm:$0x1]
    %v150 = vld [vmem:[%s62 + $0xe] sm:$0x1]
    %v151 = vld [vmem:[%s62 + $0xf] sm:$0x1]
    %v152 = vunpack.c.0.s8 %v136
    %v153 = vunpack.c.0.s8 %v137
    %v154 = vunpack.c.0.s8 %v138
    %v155 = vunpack.c.0.s8 %v139
    %v156 = vunpack.c.0.s8 %v140
    %v157 = vunpack.c.0.s8 %v141
    %v158 = vunpack.c.0.s8 %v142
    %v159 = vunpack.c.0.s8 %v143
    %v160 = vunpack.c.0.s8 %v144
    %v161 = vunpack.c.0.s8 %v145
    %v162 = vunpack.c.0.s8 %v146
    %v163 = vunpack.c.0.s8 %v147
    %v164 = vunpack.c.0.s8 %v148
    %v165 = vunpack.c.0.s8 %v149
    %v166 = vunpack.c.0.s8 %v150
    %v167 = vunpack.c.0.s8 %v151
    %v168 = vcvt.s32.f32 %v152
    %v169 = vcvt.s32.f32 %v153
    %v170 = vcvt.s32.f32 %v154
    %v171 = vcvt.s32.f32 %v155
    %v172 = vcvt.s32.f32 %v156
    %v173 = vcvt.s32.f32 %v157
    %v174 = vcvt.s32.f32 %v158
    %v175 = vcvt.s32.f32 %v159
    %v176 = vcvt.s32.f32 %v160
    %v177 = vcvt.s32.f32 %v161
    %v178 = vcvt.s32.f32 %v162
    %v179 = vcvt.s32.f32 %v163
    %v180 = vcvt.s32.f32 %v164
    %v181 = vcvt.s32.f32 %v165
    %v182 = vcvt.s32.f32 %v166
    %v183 = vcvt.s32.f32 %v167
    %v184 = vlog2.pop %v88
    %v185 = vmul.f32 %v184, 0.6931472
    %v186 = vlog2.pop %v89
    %v187 = vmul.f32 %v186, 0.6931472
    %v188 = vlog2.pop %v90
    %v189 = vmul.f32 %v188, 0.6931472
    %v190 = vlog2.pop %v91
    %v191 = vmul.f32 %v190, 0.6931472
    %v192 = vlog2.pop %v92
    %v193 = vmul.f32 %v192, 0.6931472
    %v194 = vlog2.pop %v93
    %v195 = vmul.f32 %v194, 0.6931472
    %v196 = vlog2.pop %v94
    %v197 = vmul.f32 %v196, 0.6931472
    %v198 = vlog2.pop %v95
    %v199 = vmul.f32 %v198, 0.6931472
    %v200 = vlog2.pop %v96
    %v201 = vmul.f32 %v200, 0.6931472
    %v202 = vlog2.pop %v97
    %v203 = vmul.f32 %v202, 0.6931472
    %v204 = vlog2.pop %v98
    %v205 = vmul.f32 %v204, 0.6931472
    %v206 = vlog2.pop %v99
    %v207 = vmul.f32 %v206, 0.6931472
    %v208 = vlog2.pop %v100
    %v209 = vmul.f32 %v208, 0.6931472
    %v210 = vlog2.pop %v101
    %v211 = vmul.f32 %v210, 0.6931472
    %v212 = vlog2.pop %v102
    %v213 = vmul.f32 %v212, 0.6931472
    %v214 = vlog2.pop %v103
    %v215 = vmul.f32 %v214, 0.6931472
    %v216 = vlog2.pop %v120
    %v217 = vmul.f32 %v216, 0.6931472
    %v218 = vlog2.pop %v121
    %v219 = vmul.f32 %v218, 0.6931472
    %v220 = vlog2.pop %v122
    %v221 = vmul.f32 %v220, 0.6931472
    %v222 = vlog2.pop %v123
    %v223 = vmul.f32 %v222, 0.6931472
    %v224 = vlog2.pop %v124
    %v225 = vmul.f32 %v224, 0.6931472
    %v226 = vlog2.pop %v125
    %v227 = vmul.f32 %v226, 0.6931472
    %v228 = vlog2.pop %v126
    %v229 = vmul.f32 %v228, 0.6931472
    %v230 = vlog2.pop %v127
    %v231 = vmul.f32 %v230, 0.6931472
    %v232 = vlog2.pop %v128
    %v233 = vmul.f32 %v232, 0.6931472
    %v234 = vlog2.pop %v129
    %v235 = vmul.f32 %v234, 0.6931472
    %v236 = vlog2.pop %v130
    %v237 = vmul.f32 %v236, 0.6931472
    %v238 = vlog2.pop %v131
    %v239 = vmul.f32 %v238, 0.6931472
    %v240 = vlog2.pop %v132
    %v241 = vmul.f32 %v240, 0.6931472
    %v242 = vlog2.pop %v133
    %v243 = vmul.f32 %v242, 0.6931472
    %v244 = vlog2.pop %v134
    %v245 = vmul.f32 %v244, 0.6931472
    %v246 = vlog2.pop %v135
    %v247 = vmul.f32 %v246, 0.6931472
    %v248 = vsub.f32 %v185, %v217
    %v249 = vsub.f32 %v187, %v219
    %v250 = vsub.f32 %v189, %v221
    %v251 = vsub.f32 %v191, %v223
    %v252 = vsub.f32 %v193, %v225
    %v253 = vsub.f32 %v195, %v227
    %v254 = vsub.f32 %v197, %v229
    %v255 = vsub.f32 %v199, %v231
    %v256 = vsub.f32 %v201, %v233
    %v257 = vsub.f32 %v203, %v235
    %v258 = vsub.f32 %v205, %v237
    %v259 = vsub.f32 %v207, %v239
    %v260 = vsub.f32 %v209, %v241
    %v261 = vsub.f32 %v211, %v243
    %v262 = vsub.f32 %v213, %v245
    %v263 = vsub.f32 %v215, %v247
    %v264 = vmul.f32 %v248, %v168
    %v265 = vmul.f32 %v249, %v169
    %v266 = vmul.f32 %v250, %v170
    %v267 = vmul.f32 %v251, %v171
    %v268 = vmul.f32 %v252, %v172
    %v269 = vmul.f32 %v253, %v173
    %v270 = vmul.f32 %v254, %v174
    %v271 = vmul.f32 %v255, %v175
    %v272 = vmul.f32 %v256, %v176
    %v273 = vmul.f32 %v257, %v177
    %v274 = vmul.f32 %v258, %v178
    %v275 = vmul.f32 %v259, %v179
    %v276 = vmul.f32 %v260, %v180
    %v277 = vmul.f32 %v261, %v181
    %v278 = vmul.f32 %v262, %v182
    %v279 = vmul.f32 %v263, %v183
    %v280 = vld [vmem:[#allocation5] sm:$0xff]
    %v281 = vld [vmem:[#allocation5 + $0x8] sm:$0xff]
    %v282 = vmul.f32 %v264, %v264
    %v283 = vmul.f32 %v265, %v265
    %v284 = vmul.f32 %v266, %v266
    %v285 = vmul.f32 %v267, %v267
    %v286 = vmul.f32 %v268, %v268
    %v287 = vmul.f32 %v269, %v269
    %v288 = vmul.f32 %v270, %v270
    %v289 = vmul.f32 %v271, %v271
    %v290 = vmul.f32 %v272, %v272
    %v291 = vmul.f32 %v273, %v273
    %v292 = vmul.f32 %v274, %v274
    %v293 = vmul.f32 %v275, %v275
    %v294 = vmul.f32 %v276, %v276
    %v295 = vmul.f32 %v277, %v277
    %v296 = vmul.f32 %v278, %v278
    %v297 = vmul.f32 %v279, %v279
    %v298 = vadd.f32 %v282, 0.0
    %v299 = vadd.f32 %v283, 0.0
    %v300 = vadd.f32 %v284, 0.0
    %v301 = vadd.f32 %v285, 0.0
    %v302 = vadd.f32 %v286, 0.0
    %v303 = vadd.f32 %v287, 0.0
    %v304 = vadd.f32 %v288, 0.0
    %v305 = vadd.f32 %v289, 0.0
    %v306 = vadd.f32 %v290, 0.0
    %v307 = vadd.f32 %v291, 0.0
    %v308 = vadd.f32 %v292, 0.0
    %v309 = vadd.f32 %v293, 0.0
    %v310 = vadd.f32 %v294, 0.0
    %v311 = vadd.f32 %v295, 0.0
    %v312 = vadd.f32 %v296, 0.0
    %v313 = vadd.f32 %v297, 0.0
    %v330 = vcombine.low %v298, %v299
    %v331 = vcombine.low %v300, %v301
    %v332 = vcombine.low %v302, %v303
    %v333 = vcombine.low %v304, %v305
    %v335 = vunpack.c.l.s4 1966171168
    %v336 = vunpack.c.0.s8 %v335
    %v337 = vlaneseq
    %v338 = vshrl.u32 %v337, 7
    %v339 = vsub.s32 %v336, %v338
    %v340 = vrot.slane %v330, %v339
    %v342 = vunpack.c.l.s4 1966171168
    %v343 = vunpack.c.0.s8 %v342
    %v344 = vlaneseq
    %v345 = vshrl.u32 %v344, 7
    %v346 = vsub.s32 %v343, %v345
    %v347 = vrot.slane %v331, %v346
    %v349 = vunpack.c.l.s4 1966171168
    %v350 = vunpack.c.0.s8 %v349
    %v351 = vlaneseq
    %v352 = vshrl.u32 %v351, 7
    %v353 = vsub.s32 %v350, %v352
    %v354 = vrot.slane %v332, %v353
    %v356 = vunpack.c.l.s4 1966171168
    %v357 = vunpack.c.0.s8 %v356
    %v358 = vlaneseq
    %v359 = vshrl.u32 %v358, 7
    %v360 = vsub.s32 %v357, %v359
    %v361 = vrot.slane %v333, %v360
    %v362 = vcombine.low %v340, %v347
    %v363 = vcombine.low %v354, %v361
    %v365 = vunpack.c.l.s4 1966171168
    %v366 = vunpack.c.0.s8 %v365
    %v367 = vlaneseq
    %v368 = vshrl.u32 %v367, 7
    %v369 = vsub.s32 %v366, %v368
    %v370 = vrot.slane %v362, %v369
    %v372 = vunpack.c.l.s4 1966171168
    %v373 = vunpack.c.0.s8 %v372
    %v374 = vlaneseq
    %v375 = vshrl.u32 %v374, 7
    %v376 = vsub.s32 %v373, %v375
    %v377 = vrot.slane %v363, %v376
    %v378 = vcombine.low %v370, %v377
    %v379 = vcombine.low %v306, %v307
    %v380 = vcombine.low %v308, %v309
    %v381 = vcombine.low %v310, %v311
    %v382 = vcombine.low %v312, %v313
    %v384 = vunpack.c.l.s4 1966171168
    %v385 = vunpack.c.0.s8 %v384
    %v386 = vlaneseq
    %v387 = vshrl.u32 %v386, 7
    %v388 = vsub.s32 %v385, %v387
    %v389 = vrot.slane %v379, %v388
    %v391 = vunpack.c.l.s4 1966171168
    %v392 = vunpack.c.0.s8 %v391
    %v393 = vlaneseq
    %v394 = vshrl.u32 %v393, 7
    %v395 = vsub.s32 %v392, %v394
    %v396 = vrot.slane %v380, %v395
    %v398 = vunpack.c.l.s4 1966171168
    %v399 = vunpack.c.0.s8 %v398
    %v400 = vlaneseq
    %v401 = vshrl.u32 %v400, 7
    %v402 = vsub.s32 %v399, %v401
    %v403 = vrot.slane %v381, %v402
    %v405 = vunpack.c.l.s4 1966171168
    %v406 = vunpack.c.0.s8 %v405
    %v407 = vlaneseq
    %v408 = vshrl.u32 %v407, 7
    %v409 = vsub.s32 %v406, %v408
    %v410 = vrot.slane %v382, %v409
    %v411 = vcombine.low %v389, %v396
    %v412 = vcombine.low %v403, %v410
    %v414 = vunpack.c.l.s4 1966171168
    %v415 = vunpack.c.0.s8 %v414
    %v416 = vlaneseq
    %v417 = vshrl.u32 %v416, 7
    %v418 = vsub.s32 %v415, %v417
    %v419 = vrot.slane %v411, %v418
    %v421 = vunpack.c.l.s4 1966171168
    %v422 = vunpack.c.0.s8 %v421
    %v423 = vlaneseq
    %v424 = vshrl.u32 %v423, 7
    %v425 = vsub.s32 %v422, %v424
    %v426 = vrot.slane %v412, %v425
    %v427 = vcombine.low %v419, %v426
    %v430 = vadd.f32 %v280, %v378
    %v431 = vadd.f32 %v281, %v427
    %432 = vst [vmem:[#allocation5] sm:$0xff] %v430
    %433 = vst [vmem:[#allocation5 + $0x8] sm:$0xff] %v431
    %v434 = vld [vmem:[#allocation6] sm:$0xff]
    %v435 = vld [vmem:[#allocation6 + $0x8] sm:$0xff]
    %v436 = vadd.f32 %v168, 0.0
    %v437 = vadd.f32 %v169, 0.0
    %v438 = vadd.f32 %v170, 0.0
    %v439 = vadd.f32 %v171, 0.0
    %v440 = vadd.f32 %v172, 0.0
    %v441 = vadd.f32 %v173, 0.0
    %v442 = vadd.f32 %v174, 0.0
    %v443 = vadd.f32 %v175, 0.0
    %v444 = vadd.f32 %v176, 0.0
    %v445 = vadd.f32 %v177, 0.0
    %v446 = vadd.f32 %v178, 0.0
    %v447 = vadd.f32 %v179, 0.0
    %v448 = vadd.f32 %v180, 0.0
    %v449 = vadd.f32 %v181, 0.0
    %v450 = vadd.f32 %v182, 0.0
    %v451 = vadd.f32 %v183, 0.0
    %v468 = vlaneseq
    %v469 = vshrl.u32 %v468, 7
    %v470 = vsub.s32 0, %v469
    %v471 = vrot.slane %v436, %v470
    %v472 = vlaneseq
    %v473 = vshrl.u32 %v472, 7
    %v474 = vsub.s32 0, %v473
    %v475 = vrot.slane %v437, %v474
    %v476 = vlaneseq
    %v477 = vshrl.u32 %v476, 7
    %v478 = vsub.s32 0, %v477
    %v479 = vrot.slane %v438, %v478
    %v480 = vlaneseq
    %v481 = vshrl.u32 %v480, 7
    %v482 = vsub.s32 0, %v481
    %v483 = vrot.slane %v439, %v482
    %v484 = vlaneseq
    %v485 = vshrl.u32 %v484, 7
    %v486 = vsub.s32 0, %v485
    %v487 = vrot.slane %v440, %v486
    %v488 = vlaneseq
    %v489 = vshrl.u32 %v488, 7
    %v490 = vsub.s32 0, %v489
    %v491 = vrot.slane %v441, %v490
    %v492 = vlaneseq
    %v493 = vshrl.u32 %v492, 7
    %v494 = vsub.s32 0, %v493
    %v495 = vrot.slane %v442, %v494
    %v496 = vlaneseq
    %v497 = vshrl.u32 %v496, 7
    %v498 = vsub.s32 0, %v497
    %v499 = vrot.slane %v443, %v498
    %v500 = vlaneseq
    %v501 = vshrl.u32 %v500, 7
    %v502 = vsub.s32 0, %v501
    %v503 = vrot.slane %v444, %v502
    %v504 = vlaneseq
    %v505 = vshrl.u32 %v504, 7
    %v506 = vsub.s32 0, %v505
    %v507 = vrot.slane %v445, %v506
    %v508 = vlaneseq
    %v509 = vshrl.u32 %v508, 7
    %v510 = vsub.s32 0, %v509
    %v511 = vrot.slane %v446, %v510
    %v512 = vlaneseq
    %v513 = vshrl.u32 %v512, 7
    %v514 = vsub.s32 0, %v513
    %v515 = vrot.slane %v447, %v514
    %v516 = vlaneseq
    %v517 = vshrl.u32 %v516, 7
    %v518 = vsub.s32 0, %v517
    %v519 = vrot.slane %v448, %v518
    %v520 = vlaneseq
    %v521 = vshrl.u32 %v520, 7
    %v522 = vsub.s32 0, %v521
    %v523 = vrot.slane %v449, %v522
    %v524 = vlaneseq
    %v525 = vshrl.u32 %v524, 7
    %v526 = vsub.s32 0, %v525
    %v527 = vrot.slane %v450, %v526
    %v528 = vlaneseq
    %v529 = vshrl.u32 %v528, 7
    %v530 = vsub.s32 0, %v529
    %v531 = vrot.slane %v451, %v530
    %vm532 = vcmask 1041409
    %v533 = vsel %vm532, %v475, %v471
    %vm534 = vcmask 1042434
    %v535 = vsel %vm534, %v479, %v533
    %vm536 = vcmask 1043459
    %v537 = vsel %vm536, %v483, %v535
    %vm538 = vcmask 1044484
    %v539 = vsel %vm538, %v487, %v537
    %vm540 = vcmask 1045509
    %v541 = vsel %vm540, %v491, %v539
    %vm542 = vcmask 1046534
    %v543 = vsel %vm542, %v495, %v541
    %vm544 = vcmask 1047559
    %v545 = vsel %vm544, %v499, %v543
    %v546 = vsel %vm532, %v507, %v503
    %v547 = vsel %vm534, %v511, %v546
    %v548 = vsel %vm536, %v515, %v547
    %v549 = vsel %vm538, %v519, %v548
    %v550 = vsel %vm540, %v523, %v549
    %v551 = vsel %vm542, %v527, %v550
    %v552 = vsel %vm544, %v531, %v551
    %v555 = vadd.f32 %v434, %v545
    %v556 = vadd.f32 %v435, %v552
    %557 = vst [vmem:[#allocation6] sm:$0xff] %v555
    %558 = vst [vmem:[#allocation6 + $0x8] sm:$0xff] %v556
    // Predicated region
    $region22: #{tpu_custom_call.1} parent=1 // pred_check
      _
    $region23: #{tpu_custom_call.1} parent=1 // pred_check_branch
      %560 = sbr.rel (0) target = $region25
    $region24: #{tpu_custom_call.1} parent=1 // pred_region
      %s562 = ssub.s32 256, 256
      %563 = vsyncadd [#allocation4], %s562
      %s564 = sshll.u32 [#allocation5], 4
      %s565 = int_to_ptr.vmem [resolvable:$true] %s564
      %570 = dma.vmem_to_hbm [thread:$0]  %s565, 256, %s3, [#allocation4], 128, 128, 8
    $region25: #{tpu_custom_call.1} parent=1 // pred_fallthru
      _
    // Predicated region
    $region26: #{tpu_custom_call.1} parent=1 // pred_check
      _
    $region27: #{tpu_custom_call.1} parent=1 // pred_check_branch
      %572 = sbr.rel (0) target = $region29
    $region28: #{tpu_custom_call.1} parent=1 // pred_region
      %s574 = ssub.s32 256, 256
      %575 = vsyncadd [#allocation7], %s574
      %s576 = sshll.u32 [#allocation6], 4
      %s577 = int_to_ptr.vmem [resolvable:$true] %s576
      %582 = dma.vmem_to_hbm [thread:$0]  %s577, 256, %s4, [#allocation7], 128, 128, 8
    $region29: #{tpu_custom_call.1} parent=1 // pred_fallthru
      _
    // Predicated region
    $region30: #{tpu_custom_call.1} parent=1 // pred_check
      _
    $region31: #{tpu_custom_call.1} parent=1 // pred_check_branch
      %584 = sbr.rel (0) target = $region33
    $region32: #{tpu_custom_call.1} parent=1 // pred_region
      %585 = dma.done [#allocation4], 256
    $region33: #{tpu_custom_call.1} parent=1 // pred_fallthru
      _
    // Predicated region
    $region34: #{tpu_custom_call.1} parent=1 // pred_check
      _
    $region35: #{tpu_custom_call.1} parent=1 // pred_check_branch
      %587 = sbr.rel (0) target = $region37
    $region36: #{tpu_custom_call.1} parent=1 // pred_region
      %588 = dma.done [#allocation7], 256
    $region37: #{tpu_custom_call.1} parent=1 // pred_fallthru
      _
    %589 = vsyncpa [#allocation3], 1
    %590 = vsyncpa [#allocation4], 1
    %591 = vsyncpa [#allocation7], 1

</llo_original>
